<compile_context>
chip_gen: v7x
topology: tpu7x:2x2x1
jax: 0.10.0
libtpu: 0.0.40
codegen_flags: <defaults>
</compile_context>

<pallas_src>
import functools
import math

import jax
import jax.numpy as jnp
from jax import lax
from jax.experimental import pallas as pl
from jax.experimental.pallas import tpu as pltpu

HIDDEN = 128
# With row-tiled projection and time-chunked recurrence streaming, peak VMEM is
# bounded by the tile sizes (a few MiB), so 32 MiB is safe on every generation
# (v7x physical VMEM is 64 MiB, v5e/v6e 128 MiB).
_VMEM_LIMIT = 32 * 1024 * 1024
_PROJ_ROW_BLOCK = 512      # rows of (T*B) per projection grid step
_REC_TIME_CHUNK = 128      # target timesteps per recurrence grid step


def _compiler_params(dimension_semantics):
    return pltpu.CompilerParams(dimension_semantics=dimension_semantics,
                                vmem_limit_bytes=_VMEM_LIMIT)


# ----------------------------------------------------------------------------
# Kernel 1: hoisted input projection (both directions), row-tiled pipeline
# ----------------------------------------------------------------------------
def _proj_kernel(*refs, n_inputs):
    """acc = sum_k x_k @ w_k + b ; split into forward / backward gate halves."""
    xs = refs[:n_inputs]
    ws = refs[n_inputs:2 * n_inputs]
    b_ref = refs[2 * n_inputs]
    gf_ref, gb_ref = refs[2 * n_inputs + 1], refs[2 * n_inputs + 2]
    acc = b_ref[...]
    for x_ref, w_ref in zip(xs, ws):
        acc = acc + jnp.dot(x_ref[...], w_ref[...],
                            preferred_element_type=jnp.float32)
    h4 = gf_ref.shape[-1]
    gf_ref[...] = acc[:, :h4]
    gb_ref[...] = acc[:, h4:]


def _input_projection(xs, ws, b, hidden):
    """xs: list of (N, D_k); ws: list of (D_k, 8H); b: (1, 8H) -> two (N, 4H)."""
    n = xs[0].shape[0]
    h4 = 4 * hidden
    rb = min(_PROJ_ROW_BLOCK, n)
    grid = (pl.cdiv(n, rb),)
    in_specs = ([pl.BlockSpec((rb, x.shape[1]), lambda i: (i, 0)) for x in xs]
                + [pl.BlockSpec(w.shape, lambda i: (0, 0)) for w in ws]
                + [pl.BlockSpec(b.shape, lambda i: (0, 0))])
    out_specs = [pl.BlockSpec((rb, h4), lambda i: (i, 0)),
                 pl.BlockSpec((rb, h4), lambda i: (i, 0))]
    return pl.pallas_call(
        functools.partial(_proj_kernel, n_inputs=len(xs)),
        grid=grid,
        in_specs=in_specs,
        out_specs=out_specs,
        out_shape=[jax.ShapeDtypeStruct((n, h4), jnp.float32)] * 2,
        compiler_params=_compiler_params(("parallel",)),   # megacore on v7x
    )(*xs, *ws, b)


# ----------------------------------------------------------------------------
# Kernel 2: fused fwd+bwd LSTM recurrence, streamed over time chunks
# ----------------------------------------------------------------------------
def _bilstm_chunk(gf_ref, gb_ref, whf_ref, whb_ref,
                  hf_scr, cf_scr, hb_scr, cb_scr, emit_f, emit_b):
    """One time-chunk of the bidirectional recurrence.

    gf_ref: (Tc, B, 4H) precomputed forward gates, chunk in forward time order.
    gb_ref: (Tc, B, 4H) precomputed backward gates, chunk taken from the tail
            end (reverse-ordered index_map); processed high->low locally.
    whf_ref/whb_ref: (H, 4H) recurrent weights per direction.
    *_scr: (B, H) persistent carry of h/c across grid steps.
    emit_f(local_t, h_f) / emit_b(local_t, h_b): write callbacks.
    """
    tc, _, h4 = gf_ref.shape
    h = h4 // 4

    @pl.when(pl.program_id(0) == 0)
    def _():
        for r in (hf_scr, cf_scr, hb_scr, cb_scr):
            r[...] = jnp.zeros_like(r)

    def cell(gates, c_prev):
        i = jax.nn.sigmoid(gates[:, 0 * h:1 * h])
        f = jax.nn.sigmoid(gates[:, 1 * h:2 * h])
        g = jnp.tanh(gates[:, 2 * h:3 * h])
        o = jax.nn.sigmoid(gates[:, 3 * h:4 * h])
        c = f * c_prev + i * g
        return o * jnp.tanh(c), c

    def step(s, carry):
        h_f, c_f, h_b, c_b = carry
        # Two per-direction (B,H)@(H,4H) dots (independent; scheduler interleaves
        # one direction's EUP work with the other's matmul).
        rec_f = jnp.dot(h_f, whf_ref[...], preferred_element_type=jnp.float32)
        rec_b = jnp.dot(h_b, whb_ref[...], preferred_element_type=jnp.float32)
        h_f, c_f = cell(gf_ref[s] + rec_f, c_f)
        h_b, c_b = cell(gb_ref[tc - 1 - s] + rec_b, c_b)
        emit_f(s, h_f)
        emit_b(tc - 1 - s, h_b)
        return (h_f, c_f, h_b, c_b)

    carry0 = (hf_scr[...], cf_scr[...], hb_scr[...], cb_scr[...])
    h_f, c_f, h_b, c_b = lax.fori_loop(0, tc, step, carry0, unroll=4)
    hf_scr[...] = h_f
    cf_scr[...] = c_f
    hb_scr[...] = h_b
    cb_scr[...] = c_b


def _rec_kernel(gf_ref, gb_ref, whf_ref, whb_ref, hf_out, hb_out,
                hf_scr, cf_scr, hb_scr, cb_scr):
    def emit_f(t, hv):
        hf_out[t] = hv

    def emit_b(t, hv):
        hb_out[t] = hv

    _bilstm_chunk(gf_ref, gb_ref, whf_ref, whb_ref,
                  hf_scr, cf_scr, hb_scr, cb_scr, emit_f, emit_b)


def _rec_dense_kernel(gf_ref, gb_ref, whf_ref, whb_ref, wdf_ref, wdb_ref,
                      yf_out, yb_out, hf_scr, cf_scr, hb_scr, cb_scr):
    """Layer 2: recurrence with the 256->1 dense fused into the loop."""
    def emit_f(t, hv):
        yf_out[t] = jnp.sum(hv * wdf_ref[...], axis=-1, keepdims=True)

    def emit_b(t, hv):
        yb_out[t] = jnp.sum(hv * wdb_ref[...], axis=-1, keepdims=True)

    _bilstm_chunk(gf_ref, gb_ref, whf_ref, whb_ref,
                  hf_scr, cf_scr, hb_scr, cb_scr, emit_f, emit_b)


def _pick_time_chunk(t, target=_REC_TIME_CHUNK):
    """Largest divisor of t not exceeding target (and >= 8), else whole t."""
    if t <= target:
        return t
    for c in range(target, 7, -1):
        if t % c == 0:
            return c
    # TODO(synk): no good divisor -> whole-sequence residency; could instead
    # zero-pad the (bias-included) gates along T, which leaves h=c=0 invariant.
    return t


def _bilstm_recurrence_call(gf, gb, w_hh_f, w_hh_b, hidden, dense=None):
    t, b, h4 = gf.shape
    h = hidden
    tc = _pick_time_chunk(t)
    nt = t // tc

    g_spec_f = pl.BlockSpec((tc, b, h4), lambda i: (i, 0, 0))
    g_spec_b = pl.BlockSpec((tc, b, h4), lambda i: (nt - 1 - i, 0, 0))
    w_spec = pl.BlockSpec((h, h4), lambda i: (0, 0))
    scratch = [pltpu.VMEM((b, h), jnp.float32) for _ in range(4)]
    cp = _compiler_params(("arbitrary",))

    if dense is None:
        out_f = pl.BlockSpec((tc, b, h), lambda i: (i, 0, 0))
        out_b = pl.BlockSpec((tc, b, h), lambda i: (nt - 1 - i, 0, 0))
        return pl.pallas_call(
            _rec_kernel,
            grid=(nt,),
            in_specs=[g_spec_f, g_spec_b, w_spec, w_spec],
            out_specs=[out_f, out_b],
            out_shape=[jax.ShapeDtypeStruct((t, b, h), jnp.float32)] * 2,
            scratch_shapes=scratch,
            compiler_params=cp,
        )(gf, gb, w_hh_f, w_hh_b)

    wd_f, wd_b = dense
    wd_spec = pl.BlockSpec((1, h), lambda i: (0, 0))
    out_f = pl.BlockSpec((tc, b, 1), lambda i: (i, 0, 0))
    out_b = pl.BlockSpec((tc, b, 1), lambda i: (nt - 1 - i, 0, 0))
    return pl.pallas_call(
        _rec_dense_kernel,
        grid=(nt,),
        in_specs=[g_spec_f, g_spec_b, w_spec, w_spec, wd_spec, wd_spec],
        out_specs=[out_f, out_b],
        out_shape=[jax.ShapeDtypeStruct((t, b, 1), jnp.float32)] * 2,
        scratch_shapes=scratch,
        compiler_params=cp,
    )(gf, gb, w_hh_f, w_hh_b, wd_f, wd_b)


# ----------------------------------------------------------------------------
# Wrappers
# ----------------------------------------------------------------------------
def _bilstm_layer(x_parts, p, hidden, dense=None):
    """x_parts: list of time-major (T, B, D_k); their lane-concat is the input.

    Returns (h_f, h_b) each (T, B, H), or (y_f, y_b) each (T, B, 1) if dense.
    """
    t, b = x_parts[0].shape[:2]
    h4 = 4 * hidden
    w_ih = jnp.concatenate([p["w_ih_f"], p["w_ih_b"]], axis=1)   # (D, 8H)
    bias = jnp.concatenate([p["b_f"], p["b_b"]], axis=1)         # (1, 8H)

    # Split the stacked input weight row-wise to match each input part, so
    # layer 2 never needs a (T, B, 2H) concatenation of h1_f / h1_b.
    ws, off = [], 0
    for xp in x_parts:
        d = xp.shape[-1]
        ws.append(w_ih[off:off + d])
        off += d
    xs2d = [xp.reshape(t * b, xp.shape[-1]) for xp in x_parts]   # contiguous view

    gf, gb = _input_projection(xs2d, ws, bias, hidden)
    gf = gf.reshape(t, b, h4)
    gb = gb.reshape(t, b, h4)
    return _bilstm_recurrence_call(gf, gb, p["w_hh_f"], p["w_hh_b"],
                                   hidden, dense=dense)


def audio_bilstm_forward(x, params):
    """Pallas implementation of AudioBiLSTM.forward.  x: (B, T, num_features)."""
    bsz, t, _ = x.shape
    x_tbd = jnp.transpose(x, (1, 0, 2))                 # time-major, once
    pad = (-bsz) % 8                                    # pad batch to f32 sublane
    if pad:
        x_tbd = jnp.pad(x_tbd, ((0, 0), (0, pad), (0, 0)))

    h1_f, h1_b = _bilstm_layer([x_tbd], params["lstm1"], HIDDEN)

    wd = params["dense_w"]                              # (2H, 1)
    wd_f = wd[:HIDDEN, 0].reshape(1, HIDDEN)
    wd_b = wd[HIDDEN:, 0].reshape(1, HIDDEN)
    y_f, y_b = _bilstm_layer([h1_f, h1_b], params["lstm2"], HIDDEN,
                             dense=(wd_f, wd_b))        # each (T, Bp, 1)

    y = y_f + y_b + params["dense_b"].reshape(())       # combine partial dense sums
    y = y[:, :bsz, :]                                   # drop batch padding
    return jnp.transpose(y, (1, 0, 2))                  # batch-first, once


# ----------------------------------------------------------------------------
# Pure-JAX reference (HIGHEST-precision matmuls so it bounds true kernel error)
# ----------------------------------------------------------------------------
def _lstm_direction_ref(x_tbd, w_ih, w_hh, b):
    h_dim = w_hh.shape[0]
    bsz = x_tbd.shape[1]
    hp = lax.Precision.HIGHEST

    def step(carry, x_t):
        h, c = carry
        gates = jnp.dot(x_t, w_ih, precision=hp) + jnp.dot(h, w_hh, precision=hp) + b
        i = jax.nn.sigmoid(gates[:, 0 * h_dim:1 * h_dim])
        f = jax.nn.sigmoid(gates[:, 1 * h_dim:2 * h_dim])
        g = jnp.tanh(gates[:, 2 * h_dim:3 * h_dim])
        o = jax.nn.sigmoid(gates[:, 3 * h_dim:4 * h_dim])
        c = f * c + i * g
        h = o * jnp.tanh(c)
        return (h, c), h

    init = (jnp.zeros((bsz, h_dim), jnp.float32), jnp.zeros((bsz, h_dim), jnp.float32))
    _, hs = lax.scan(step, init, x_tbd)
    return hs


def _bilstm_layer_ref(x_btd, p):
    x_tbd = jnp.transpose(x_btd, (1, 0, 2))
    h_fwd = _lstm_direction_ref(x_tbd, p["w_ih_f"], p["w_hh_f"], p["b_f"])
    h_bwd = _lstm_direction_ref(x_tbd[::-1], p["w_ih_b"], p["w_hh_b"], p["b_b"])[::-1]
    h = jnp.concatenate([h_fwd, h_bwd], axis=-1)
    return jnp.transpose(h, (1, 0, 2))


def audio_bilstm_ref(x, params):
    out = _bilstm_layer_ref(x, params["lstm1"])
    out = _bilstm_layer_ref(out, params["lstm2"])
    return (jnp.dot(out, params["dense_w"], precision=lax.Precision.HIGHEST)
            + params["dense_b"])


# ----------------------------------------------------------------------------
# Deterministic parameter init (PyTorch-style uniform(-1/sqrt(H), 1/sqrt(H)))
# ----------------------------------------------------------------------------
def _init_bilstm_params(key, in_dim, hidden):
    bound = 1.0 / math.sqrt(hidden)
    ks = jax.random.split(key, 8)

    def u(k, shape):
        return jax.random.uniform(k, shape, jnp.float32, -bound, bound)

    return {
        "w_ih_f": u(ks[0], (in_dim, 4 * hidden)),
        "w_hh_f": u(ks[1], (hidden, 4 * hidden)),
        "b_f":    u(ks[2], (1, 4 * hidden)),
        "w_ih_b": u(ks[3], (in_dim, 4 * hidden)),
        "w_hh_b": u(ks[4], (hidden, 4 * hidden)),
        "b_b":    u(ks[5], (1, 4 * hidden)),
    }


def init_params(key, num_features, hidden=HIDDEN):
    k1, k2, k3, k4 = jax.random.split(key, 4)
    bound = 1.0 / math.sqrt(2 * hidden)
    return {
        "lstm1": _init_bilstm_params(k1, num_features, hidden),
        "lstm2": _init_bilstm_params(k2, 2 * hidden, hidden),
        "dense_w": jax.random.uniform(k3, (2 * hidden, 1), jnp.float32, -bound, bound),
        "dense_b": jax.random.uniform(k4, (1, 1), jnp.float32, -bound, bound),
    }


# ----------------------------------------------------------------------------
if __name__ == "__main__":
    key = jax.random.PRNGKey(0)
    k_x, k_p = jax.random.split(key)

    B, T, NUM_FEATURES = 2, 8, 32
    x = jax.random.normal(k_x, (B, T, NUM_FEATURES), jnp.float32)
    params = init_params(k_p, NUM_FEATURES)

    y = jax.block_until_ready(audio_bilstm_forward(x, params))
    assert y.shape == (B, T, 1), y.shape

    y_ref = jax.block_until_ready(audio_bilstm_ref(x, params))
    max_err = float(jnp.max(jnp.abs(y - y_ref)))
    assert jnp.allclose(y, y_ref, atol=2e-3, rtol=2e-3), max_err

    print("KERNEL_OK")
</pallas_src>

<mosaic_0001>
module attributes {stable_mosaic.version = 11 : i64} {
  func.func @_proj_kernel(%arg0: i32, %arg1: memref<64x32xf32, #tpu.memory_space<vmem>>, %arg2: memref<32x1024xf32, #tpu.memory_space<vmem>>, %arg3: memref<1x1024xf32, #tpu.memory_space<vmem>>, %arg4: memref<64x512xf32, #tpu.memory_space<vmem>>, %arg5: memref<64x512xf32, #tpu.memory_space<vmem>>) attributes {dimension_semantics = [#tpu.dimension_semantics<parallel>], iteration_bounds = array<i64: 1>, scalar_prefetch = 0 : i64, scratch_operands = 0 : i64, tpu.core_type = #tpu.core_type<tc>, window_params = [{transform_indices = @transform_0, window_bounds = array<i64: 64, 32>}, {pipeline_mode = #tpu.pipeline_mode<synchronous>, transform_indices = @transform_1, window_bounds = array<i64: 32, 1024>}, {pipeline_mode = #tpu.pipeline_mode<synchronous>, transform_indices = @transform_2, window_bounds = array<i64: 1, 1024>}, {transform_indices = @transform_3, window_bounds = array<i64: 64, 512>}, {transform_indices = @transform_4, window_bounds = array<i64: 64, 512>}]} {
    %c0 = arith.constant 0 : index
    %c0_0 = arith.constant 0 : index
    %0 = vector.load %arg3[%c0, %c0_0] : memref<1x1024xf32, #tpu.memory_space<vmem>>, vector<1x1024xf32>
    %c0_1 = arith.constant 0 : index
    %c0_2 = arith.constant 0 : index
    %1 = vector.load %arg1[%c0_1, %c0_2] : memref<64x32xf32, #tpu.memory_space<vmem>>, vector<64x32xf32>
    %c0_3 = arith.constant 0 : index
    %c0_4 = arith.constant 0 : index
    %2 = vector.load %arg2[%c0_3, %c0_4] : memref<32x1024xf32, #tpu.memory_space<vmem>>, vector<32x1024xf32>
    %cst = arith.constant dense<0.000000e+00> : vector<64x1024xf32>
    %3 = tpu.matmul %1, %2, %cst {dimension_numbers = #tpu.dot_dimension_numbers<[1], [0], [0], [1], [0, 0, 1, 1], [], []>} : vector<64x32xf32>, vector<32x1024xf32>, vector<64x1024xf32> -> vector<64x1024xf32>
    %4 = vector.broadcast %0 : vector<1x1024xf32> to vector<64x1024xf32>
    %5 = arith.addf %4, %3 : vector<64x1024xf32>
    %6 = vector.extract_strided_slice %5 {offsets = [0, 0], sizes = [64, 512], strides = [1, 1]} : vector<64x1024xf32> to vector<64x512xf32>
    %c0_5 = arith.constant 0 : index
    %c0_6 = arith.constant 0 : index
    %7 = vector.load %arg4[%c0_5, %c0_6] : memref<64x512xf32, #tpu.memory_space<vmem>>, vector<64x512xf32>
    tpu.vector_store %arg4[%c0_5, %c0_6], %6 {strides = array<i32>} : memref<64x512xf32, #tpu.memory_space<vmem>>, vector<64x512xf32>,
    %8 = vector.extract_strided_slice %5 {offsets = [0, 512], sizes = [64, 512], strides = [1, 1]} : vector<64x1024xf32> to vector<64x512xf32>
    %c0_7 = arith.constant 0 : index
    %c0_8 = arith.constant 0 : index
    %9 = vector.load %arg5[%c0_7, %c0_8] : memref<64x512xf32, #tpu.memory_space<vmem>>, vector<64x512xf32>
    tpu.vector_store %arg5[%c0_7, %c0_8], %8 {strides = array<i32>} : memref<64x512xf32, #tpu.memory_space<vmem>>, vector<64x512xf32>,
    return
  }
  func.func @transform_0(%arg0: i32) -> (i32, i32) {
    %c0_i32 = arith.constant 0 : i32
    %c0_i32_0 = arith.constant 0 : i32
    return %arg0, %c0_i32 : i32, i32
  }
  func.func @transform_1(%arg0: i32) -> (i32, i32) {
    %c0_i32 = arith.constant 0 : i32
    %c0_i32_0 = arith.constant 0 : i32
    %c0_i32_1 = arith.constant 0 : i32
    return %c0_i32, %c0_i32_0 : i32, i32
  }
  func.func @transform_2(%arg0: i32) -> (i32, i32) {
    %c0_i32 = arith.constant 0 : i32
    %c0_i32_0 = arith.constant 0 : i32
    %c0_i32_1 = arith.constant 0 : i32
    return %c0_i32, %c0_i32_0 : i32, i32
  }
  func.func @transform_3(%arg0: i32) -> (i32, i32) {
    %c0_i32 = arith.constant 0 : i32
    %c0_i32_0 = arith.constant 0 : i32
    return %arg0, %c0_i32 : i32, i32
  }
  func.func @transform_4(%arg0: i32) -> (i32, i32) {
    %c0_i32 = arith.constant 0 : i32
    %c0_i32_0 = arith.constant 0 : i32
    return %arg0, %c0_i32 : i32, i32
  }
}

</mosaic_0001>

<llo_original>
// kernel: tpu_custom_call.1
$region0: #{tpu_custom_call.1}
  #allocation0 [shape = 'u32[]', space=smem, size = 0x4, offset = 0x4, fixed_abs, tag = 'smem constant byte address 0x4 - core index']
  #allocation1 [shape = 'u32[144,128]{1,0:T(1,128)}', space=vmem, size = 0x12000, scoped, tag = 'internal scratch']
  %s0 = inlined_call_operand.vmem [shape: f32[64,32], index: 0, kind: input, shape index: {}]
  %s1 = inlined_call_operand.hbm [shape: f32[32,1024], index: 1, kind: input, shape index: {}]
  %s2 = inlined_call_operand.vmem [shape: f32[1,1024], index: 2, kind: input, shape index: {}]
  %s3 = inlined_call_operand.hbm [shape: f32[64,512], index: 3, kind: output, shape index: {0}]
  %s4 = inlined_call_operand.hbm [shape: f32[64,512], index: 4, kind: output, shape index: {1}]
  %5 = xla_tuple %s3, %s4
  %s6 = sld [smem:[#allocation0]]
  $region34: #{tpu_custom_call.1} parent=0
    _
  %s8 = ssub.s32 1, %s6
  %s9 = scalar_select 0, %s8, %s6
  $region1: #{tpu_custom_call.1} parent=0
    #allocation2 [shape = 'u8[131072]{0}', space=vmem, size = 0x20000, scoped, tag = 'input window, operand 1, single buffered']
    #allocation3 [shape = 's32[1]{0}', space=sflag, size = 0x4, scoped, tag = 'scoped memory for tpu_custom_call.1']
    #allocation4 [shape = 's32[1]{0}', space=sflag, size = 0x4, scoped, tag = 'scoped memory for tpu_custom_call.1']
    #allocation5 [shape = 'u8[131072]{0}', space=vmem, size = 0x20000, scoped, tag = 'output window, operand 0, single buffered']
    #allocation6 [shape = 'u8[131072]{0}', space=vmem, size = 0x20000, scoped, tag = 'output window, operand 1, single buffered']
    #allocation7 [shape = 's32[1]{0}', space=sflag, size = 0x4, scoped, tag = 'scoped memory for tpu_custom_call.1']
    %10 = vsyncpa [#allocation3], 0
    %11 = vsyncpa [#allocation4], 0
    %12 = vsyncpa [#allocation7], 0
    // Predicated region
    $region2: #{tpu_custom_call.1} parent=1 // pred_check
      _
    $region3: #{tpu_custom_call.1} parent=1 // pred_check_branch
      %14 = sbr.rel (0) target = $region5
    $region4: #{tpu_custom_call.1} parent=1 // pred_region
      _
    $region5: #{tpu_custom_call.1} parent=1 // pred_fallthru
      _
    // Predicated region
    $region6: #{tpu_custom_call.1} parent=1 // pred_check
      _
    $region7: #{tpu_custom_call.1} parent=1 // pred_check_branch
      %16 = sbr.rel (0) target = $region9
    $region8: #{tpu_custom_call.1} parent=1 // pred_region
      %s18 = ssub.s32 4096, 4096
      %19 = vsyncadd [#allocation3], %s18
      %s20 = sshll.u32 [#allocation2], 4
      %s21 = int_to_ptr.vmem [resolvable:$true] %s20
      %26 = dma.hbm_to_vmem [thread:$0]  %s1, 4096, %s21, [#allocation3], 1024, 1024, 64
    $region9: #{tpu_custom_call.1} parent=1 // pred_fallthru
      _
    // Predicated region
    $region10: #{tpu_custom_call.1} parent=1 // pred_check
      _
    $region11: #{tpu_custom_call.1} parent=1 // pred_check_branch
      %28 = sbr.rel (0) target = $region13
    $region12: #{tpu_custom_call.1} parent=1 // pred_region
      _
    $region13: #{tpu_custom_call.1} parent=1 // pred_fallthru
      _
    // Predicated region
    $region14: #{tpu_custom_call.1} parent=1 // pred_check
      _
    $region15: #{tpu_custom_call.1} parent=1 // pred_check_branch
      %30 = sbr.rel (0) target = $region17
    $region16: #{tpu_custom_call.1} parent=1 // pred_region
      %31 = dma.done [#allocation3], 4096
    $region17: #{tpu_custom_call.1} parent=1 // pred_fallthru
      _
    %v32 = vld [vmem:[%s2] sm:$0xff]
    %v33 = vld [vmem:[%s0] sm:$0xff]
    %v34 = vld [vmem:[%s0 + $0x8] sm:$0xff]
    %v35 = vld [vmem:[%s0 + $0x10] sm:$0xff]
    %v36 = vld [vmem:[%s0 + $0x18] sm:$0xff]
    %v37 = vld [vmem:[%s0 + $0x20] sm:$0xff]
    %v38 = vld [vmem:[%s0 + $0x28] sm:$0xff]
    %v39 = vld [vmem:[%s0 + $0x30] sm:$0xff]
    %v40 = vld [vmem:[%s0 + $0x38] sm:$0xff]
    %v41 = vld [vmem:[#allocation2] sm:$0xff]
    %v42 = vld [vmem:[#allocation2 + $0x8] sm:$0xff]
    %v43 = vld [vmem:[#allocation2 + $0x10] sm:$0xff]
    %v44 = vld [vmem:[#allocation2 + $0x18] sm:$0xff]
    %v45 = vld [vmem:[#allocation2 + $0x20] sm:$0xff]
    %v46 = vld [vmem:[#allocation2 + $0x28] sm:$0xff]
    %v47 = vld [vmem:[#allocation2 + $0x30] sm:$0xff]
    %v48 = vld [vmem:[#allocation2 + $0x38] sm:$0xff]
    %v49 = vld [vmem:[#allocation2 + $0x40] sm:$0xff]
    %v50 = vld [vmem:[#allocation2 + $0x48] sm:$0xff]
    %v51 = vld [vmem:[#allocation2 + $0x50] sm:$0xff]
    %v52 = vld [vmem:[#allocation2 + $0x58] sm:$0xff]
    %v53 = vld [vmem:[#allocation2 + $0x60] sm:$0xff]
    %v54 = vld [vmem:[#allocation2 + $0x68] sm:$0xff]
    %v55 = vld [vmem:[#allocation2 + $0x70] sm:$0xff]
    %v56 = vld [vmem:[#allocation2 + $0x78] sm:$0xff]
    %v57 = vld [vmem:[#allocation2 + $0x80] sm:$0xff]
    %v58 = vld [vmem:[#allocation2 + $0x88] sm:$0xff]
    %v59 = vld [vmem:[#allocation2 + $0x90] sm:$0xff]
    %v60 = vld [vmem:[#allocation2 + $0x98] sm:$0xff]
    %v61 = vld [vmem:[#allocation2 + $0xa0] sm:$0xff]
    %v62 = vld [vmem:[#allocation2 + $0xa8] sm:$0xff]
    %v63 = vld [vmem:[#allocation2 + $0xb0] sm:$0xff]
    %v64 = vld [vmem:[#allocation2 + $0xb8] sm:$0xff]
    %v65 = vld [vmem:[#allocation2 + $0xc0] sm:$0xff]
    %v66 = vld [vmem:[#allocation2 + $0xc8] sm:$0xff]
    %v67 = vld [vmem:[#allocation2 + $0xd0] sm:$0xff]
    %v68 = vld [vmem:[#allocation2 + $0xd8] sm:$0xff]
    %v69 = vld [vmem:[#allocation2 + $0xe0] sm:$0xff]
    %v70 = vld [vmem:[#allocation2 + $0xe8] sm:$0xff]
    %v71 = vld [vmem:[#allocation2 + $0xf0] sm:$0xff]
    %v72 = vld [vmem:[#allocation2 + $0xf8] sm:$0xff]
    %vm73 = vcmask 261120
    %v75 = vsel %vm73, %v33, 0
    %v78 = vsel %vm73, %v34, 0
    %v81 = vsel %vm73, %v35, 0
    %v84 = vsel %vm73, %v36, 0
    %v87 = vsel %vm73, %v37, 0
    %v90 = vsel %vm73, %v38, 0
    %v93 = vsel %vm73, %v39, 0
    %v96 = vsel %vm73, %v40, 0
    %98 = vmatprep.subr.mxu0 %v42
    %99 = vmatpush1.msra.mxu0 %v41
    %100 = vmatprep.subr.mxu0 %v50
    %101 = vmatpush1.msra.mxu0 %v49
    %102 = vmatprep.subr.mxu0 %v58
    %103 = vmatpush1.msra.mxu0 %v57
    %104 = vmatprep.subr.mxu0 %v66
    %105 = vmatpush1.msra.mxu0 %v65
    %106 = vmatprep.subr.mxu0 0.0
    %107 = vmatpush1.msra.mxu0 0.0
    %108 = vmatprep.subr.mxu0 0.0
    %109 = vmatpush1.msra.mxu0 0.0
    %110 = vmatprep.subr.mxu0 0.0
    %111 = vmatpush1.msra.mxu0 0.0
    %112 = vmatprep.subr.mxu0 0.0
    %113 = vmatpush1.msra.mxu0 0.0
    %114 = vmatprep.subr.mxu0 0.0
    %115 = vmatpush1.msra.mxu0 0.0
    %116 = vmatprep.subr.mxu0 0.0
    %117 = vmatpush1.msra.mxu0 0.0
    %118 = vmatprep.subr.mxu0 0.0
    %119 = vmatpush1.msra.mxu0 0.0
    %120 = vmatprep.subr.mxu0 0.0
    %121 = vmatpush1.msra.mxu0 0.0
    %122 = vmatprep.subr.mxu0 0.0
    %123 = vmatpush1.msra.mxu0 0.0
    %124 = vmatprep.subr.mxu0 0.0
    %125 = vmatpush1.msra.mxu0 0.0
    %126 = vmatprep.subr.mxu0 0.0
    %127 = vmatpush1.msra.mxu0 0.0
    %128 = vmatprep.subr.mxu0 0.0
    %129 = vmatpush1.msra.mxu0 0.0
    %130 = vmatprep.subr.mxu0 0.0
    %131 = vmatpush1.msra.mxu0 0.0
    %132 = vmatprep.subr.mxu0 0.0
    %133 = vmatpush1.msra.mxu0 0.0
    %134 = vmatprep.subr.mxu0 0.0
    %135 = vmatpush1.msra.mxu0 0.0
    %136 = vmatprep.subr.mxu0 0.0
    %137 = vmatpush1.msra.mxu0 0.0
    %138 = vmatprep.subr.mxu0 0.0
    %139 = vmatpush1.msra.mxu0 0.0
    %140 = vmatprep.subr.mxu0 0.0
    %141 = vmatpush1.msra.mxu0 0.0
    %142 = vmatprep.subr.mxu0 0.0
    %143 = vmatpush1.msra.mxu0 0.0
    %144 = vmatprep.subr.mxu0 0.0
    %145 = vmatpush1.msra.mxu0 0.0
    %146 = vmatprep.subr.mxu0 0.0
    %147 = vmatpush1.msra.mxu0 0.0
    %148 = vmatprep.subr.mxu0 0.0
    %149 = vmatpush1.msra.mxu0 0.0
    %150 = vmatprep.subr.mxu0 0.0
    %151 = vmatpush1.msra.mxu0 0.0
    %152 = vmatprep.subr.mxu0 0.0
    %153 = vmatpush1.msra.mxu0 0.0
    %154 = vmatprep.subr.mxu0 0.0
    %155 = vmatpush1.msra.mxu0 0.0
    %156 = vmatprep.subr.mxu0 0.0
    %157 = vmatpush1.msra.mxu0 0.0
    %158 = vmatprep.subr.mxu0 0.0
    %159 = vmatpush1.msra.mxu0 0.0
    %160 = vmatprep.subr.mxu0 0.0
    %161 = vmatpush1.msra.mxu0 0.0
    %162 = vmatprep.mubr.f32.mxu0 0.0
    %163 = vmatmul.mubr.f32.gmra.mrb[0].mxu0 %v75
    %v164 = vpop.f32.mrb[0].mxu0
    %v165 = vadd.f32 0.0, %v164
    %v166 = vpop.f32.mrb[0].mxu0
    %v167 = vadd.f32 0.0, %v166
    %168 = vmatprep.mubr.f32.mxu0 0.0
    %169 = vmatmul.mubr.f32.gmra.mrb[0].mxu0 %v78
    %v170 = vpop.f32.mrb[0].mxu0
    %v171 = vadd.f32 0.0, %v170
    %v172 = vpop.f32.mrb[0].mxu0
    %v173 = vadd.f32 0.0, %v172
    %174 = vmatprep.mubr.f32.mxu0 0.0
    %175 = vmatmul.mubr.f32.gmra.mrb[0].mxu0 %v81
    %v176 = vpop.f32.mrb[0].mxu0
    %v177 = vadd.f32 0.0, %v176
    %v178 = vpop.f32.mrb[0].mxu0
    %v179 = vadd.f32 0.0, %v178
    %180 = vmatprep.mubr.f32.mxu0 0.0
    %181 = vmatmul.mubr.f32.gmra.mrb[0].mxu0 %v84
    %v182 = vpop.f32.mrb[0].mxu0
    %v183 = vadd.f32 0.0, %v182
    %v184 = vpop.f32.mrb[0].mxu0
    %v185 = vadd.f32 0.0, %v184
    %186 = vmatprep.mubr.f32.mxu0 0.0
    %187 = vmatmul.mubr.f32.gmra.mrb[0].mxu0 %v87
    %v188 = vpop.f32.mrb[0].mxu0
    %v189 = vadd.f32 0.0, %v188
    %v190 = vpop.f32.mrb[0].mxu0
    %v191 = vadd.f32 0.0, %v190
    %192 = vmatprep.mubr.f32.mxu0 0.0
    %193 = vmatmul.mubr.f32.gmra.mrb[0].mxu0 %v90
    %v194 = vpop.f32.mrb[0].mxu0
    %v195 = vadd.f32 0.0, %v194
    %v196 = vpop.f32.mrb[0].mxu0
    %v197 = vadd.f32 0.0, %v196
    %198 = vmatprep.mubr.f32.mxu0 0.0
    %199 = vmatmul.mubr.f32.gmra.mrb[0].mxu0 %v93
    %v200 = vpop.f32.mrb[0].mxu0
    %v201 = vadd.f32 0.0, %v200
    %v202 = vpop.f32.mrb[0].mxu0
    %v203 = vadd.f32 0.0, %v202
    %204 = vmatprep.mubr.f32.mxu0 0.0
    %205 = vmatmul.mubr.f32.gmra.mrb[0].mxu0 %v96
    %v206 = vpop.f32.mrb[0].mxu0
    %v207 = vadd.f32 0.0, %v206
    %v208 = vpop.f32.mrb[0].mxu0
    %v209 = vadd.f32 0.0, %v208
    %210 = vdwg.mxu0
    %211 = vmatprep.subr.mxu0 %v44
    %212 = vmatpush1.msra.mxu0 %v43
    %213 = vmatprep.subr.mxu0 %v52
    %214 = vmatpush1.msra.mxu0 %v51
    %215 = vmatprep.subr.mxu0 %v60
    %216 = vmatpush1.msra.mxu0 %v59
    %217 = vmatprep.subr.mxu0 %v68
    %218 = vmatpush1.msra.mxu0 %v67
    %219 = vmatprep.subr.mxu0 0.0
    %220 = vmatpush1.msra.mxu0 0.0
    %221 = vmatprep.subr.mxu0 0.0
    %222 = vmatpush1.msra.mxu0 0.0
    %223 = vmatprep.subr.mxu0 0.0
    %224 = vmatpush1.msra.mxu0 0.0
    %225 = vmatprep.subr.mxu0 0.0
    %226 = vmatpush1.msra.mxu0 0.0
    %227 = vmatprep.subr.mxu0 0.0
    %228 = vmatpush1.msra.mxu0 0.0
    %229 = vmatprep.subr.mxu0 0.0
    %230 = vmatpush1.msra.mxu0 0.0
    %231 = vmatprep.subr.mxu0 0.0
    %232 = vmatpush1.msra.mxu0 0.0
    %233 = vmatprep.subr.mxu0 0.0
    %234 = vmatpush1.msra.mxu0 0.0
    %235 = vmatprep.subr.mxu0 0.0
    %236 = vmatpush1.msra.mxu0 0.0
    %237 = vmatprep.subr.mxu0 0.0
    %238 = vmatpush1.msra.mxu0 0.0
    %239 = vmatprep.subr.mxu0 0.0
    %240 = vmatpush1.msra.mxu0 0.0
    %241 = vmatprep.subr.mxu0 0.0
    %242 = vmatpush1.msra.mxu0 0.0
    %243 = vmatprep.subr.mxu0 0.0
    %244 = vmatpush1.msra.mxu0 0.0
    %245 = vmatprep.subr.mxu0 0.0
    %246 = vmatpush1.msra.mxu0 0.0
    %247 = vmatprep.subr.mxu0 0.0
    %248 = vmatpush1.msra.mxu0 0.0
    %249 = vmatprep.subr.mxu0 0.0
    %250 = vmatpush1.msra.mxu0 0.0
    %251 = vmatprep.subr.mxu0 0.0
    %252 = vmatpush1.msra.mxu0 0.0
    %253 = vmatprep.subr.mxu0 0.0
    %254 = vmatpush1.msra.mxu0 0.0
    %255 = vmatprep.subr.mxu0 0.0
    %256 = vmatpush1.msra.mxu0 0.0
    %257 = vmatprep.subr.mxu0 0.0
    %258 = vmatpush1.msra.mxu0 0.0
    %259 = vmatprep.subr.mxu0 0.0
    %260 = vmatpush1.msra.mxu0 0.0
    %261 = vmatprep.subr.mxu0 0.0
    %262 = vmatpush1.msra.mxu0 0.0
    %263 = vmatprep.subr.mxu0 0.0
    %264 = vmatpush1.msra.mxu0 0.0
    %265 = vmatprep.subr.mxu0 0.0
    %266 = vmatpush1.msra.mxu0 0.0
    %267 = vmatprep.subr.mxu0 0.0
    %268 = vmatpush1.msra.mxu0 0.0
    %269 = vmatprep.subr.mxu0 0.0
    %270 = vmatpush1.msra.mxu0 0.0
    %271 = vmatprep.subr.mxu0 0.0
    %272 = vmatpush1.msra.mxu0 0.0
    %273 = vmatprep.subr.mxu0 0.0
    %274 = vmatpush1.msra.mxu0 0.0
    %275 = vmatprep.mubr.f32.mxu0 0.0
    %276 = vmatmul.mubr.f32.gmra.mrb[0].mxu0 %v75
    %v277 = vpop.f32.mrb[0].mxu0
    %v278 = vadd.f32 0.0, %v277
    %v279 = vpop.f32.mrb[0].mxu0
    %v280 = vadd.f32 0.0, %v279
    %281 = vmatprep.mubr.f32.mxu0 0.0
    %282 = vmatmul.mubr.f32.gmra.mrb[0].mxu0 %v78
    %v283 = vpop.f32.mrb[0].mxu0
    %v284 = vadd.f32 0.0, %v283
    %v285 = vpop.f32.mrb[0].mxu0
    %v286 = vadd.f32 0.0, %v285
    %287 = vmatprep.mubr.f32.mxu0 0.0
    %288 = vmatmul.mubr.f32.gmra.mrb[0].mxu0 %v81
    %v289 = vpop.f32.mrb[0].mxu0
    %v290 = vadd.f32 0.0, %v289
    %v291 = vpop.f32.mrb[0].mxu0
    %v292 = vadd.f32 0.0, %v291
    %293 = vmatprep.mubr.f32.mxu0 0.0
    %294 = vmatmul.mubr.f32.gmra.mrb[0].mxu0 %v84
    %v295 = vpop.f32.mrb[0].mxu0
    %v296 = vadd.f32 0.0, %v295
    %v297 = vpop.f32.mrb[0].mxu0
    %v298 = vadd.f32 0.0, %v297
    %299 = vmatprep.mubr.f32.mxu0 0.0
    %300 = vmatmul.mubr.f32.gmra.mrb[0].mxu0 %v87
    %v301 = vpop.f32.mrb[0].mxu0
    %v302 = vadd.f32 0.0, %v301
    %v303 = vpop.f32.mrb[0].mxu0
    %v304 = vadd.f32 0.0, %v303
    %305 = vmatprep.mubr.f32.mxu0 0.0
    %306 = vmatmul.mubr.f32.gmra.mrb[0].mxu0 %v90
    %v307 = vpop.f32.mrb[0].mxu0
    %v308 = vadd.f32 0.0, %v307
    %v309 = vpop.f32.mrb[0].mxu0
    %v310 = vadd.f32 0.0, %v309
    %311 = vmatprep.mubr.f32.mxu0 0.0
    %312 = vmatmul.mubr.f32.gmra.mrb[0].mxu0 %v93
    %v313 = vpop.f32.mrb[0].mxu0
    %v314 = vadd.f32 0.0, %v313
    %v315 = vpop.f32.mrb[0].mxu0
    %v316 = vadd.f32 0.0, %v315
    %317 = vmatprep.mubr.f32.mxu0 0.0
    %318 = vmatmul.mubr.f32.gmra.mrb[0].mxu0 %v96
    %v319 = vpop.f32.mrb[0].mxu0
    %v320 = vadd.f32 0.0, %v319
    %v321 = vpop.f32.mrb[0].mxu0
    %v322 = vadd.f32 0.0, %v321
    %323 = vdwg.mxu0
    %324 = vmatprep.subr.mxu0 %v46
    %325 = vmatpush1.msra.mxu0 %v45
    %326 = vmatprep.subr.mxu0 %v54
    %327 = vmatpush1.msra.mxu0 %v53
    %328 = vmatprep.subr.mxu0 %v62
    %329 = vmatpush1.msra.mxu0 %v61
    %330 = vmatprep.subr.mxu0 %v70
    %331 = vmatpush1.msra.mxu0 %v69
    %332 = vmatprep.subr.mxu0 0.0
    %333 = vmatpush1.msra.mxu0 0.0
    %334 = vmatprep.subr.mxu0 0.0
    %335 = vmatpush1.msra.mxu0 0.0
    %336 = vmatprep.subr.mxu0 0.0
    %337 = vmatpush1.msra.mxu0 0.0
    %338 = vmatprep.subr.mxu0 0.0
    %339 = vmatpush1.msra.mxu0 0.0
    %340 = vmatprep.subr.mxu0 0.0
    %341 = vmatpush1.msra.mxu0 0.0
    %342 = vmatprep.subr.mxu0 0.0
    %343 = vmatpush1.msra.mxu0 0.0
    %344 = vmatprep.subr.mxu0 0.0
    %345 = vmatpush1.msra.mxu0 0.0
    %346 = vmatprep.subr.mxu0 0.0
    %347 = vmatpush1.msra.mxu0 0.0
    %348 = vmatprep.subr.mxu0 0.0
    %349 = vmatpush1.msra.mxu0 0.0
    %350 = vmatprep.subr.mxu0 0.0
    %351 = vmatpush1.msra.mxu0 0.0
    %352 = vmatprep.subr.mxu0 0.0
    %353 = vmatpush1.msra.mxu0 0.0
    %354 = vmatprep.subr.mxu0 0.0
    %355 = vmatpush1.msra.mxu0 0.0
    %356 = vmatprep.subr.mxu0 0.0
    %357 = vmatpush1.msra.mxu0 0.0
    %358 = vmatprep.subr.mxu0 0.0
    %359 = vmatpush1.msra.mxu0 0.0
    %360 = vmatprep.subr.mxu0 0.0
    %361 = vmatpush1.msra.mxu0 0.0
    %362 = vmatprep.subr.mxu0 0.0
    %363 = vmatpush1.msra.mxu0 0.0
    %364 = vmatprep.subr.mxu0 0.0
    %365 = vmatpush1.msra.mxu0 0.0
    %366 = vmatprep.subr.mxu0 0.0
    %367 = vmatpush1.msra.mxu0 0.0
    %368 = vmatprep.subr.mxu0 0.0
    %369 = vmatpush1.msra.mxu0 0.0
    %370 = vmatprep.subr.mxu0 0.0
    %371 = vmatpush1.msra.mxu0 0.0
    %372 = vmatprep.subr.mxu0 0.0
    %373 = vmatpush1.msra.mxu0 0.0
    %374 = vmatprep.subr.mxu0 0.0
    %375 = vmatpush1.msra.mxu0 0.0
    %376 = vmatprep.subr.mxu0 0.0
    %377 = vmatpush1.msra.mxu0 0.0
    %378 = vmatprep.subr.mxu0 0.0
    %379 = vmatpush1.msra.mxu0 0.0
    %380 = vmatprep.subr.mxu0 0.0
    %381 = vmatpush1.msra.mxu0 0.0
    %382 = vmatprep.subr.mxu0 0.0
    %383 = vmatpush1.msra.mxu0 0.0
    %384 = vmatprep.subr.mxu0 0.0
    %385 = vmatpush1.msra.mxu0 0.0
    %386 = vmatprep.subr.mxu0 0.0
    %387 = vmatpush1.msra.mxu0 0.0
    %388 = vmatprep.mubr.f32.mxu0 0.0
    %389 = vmatmul.mubr.f32.gmra.mrb[0].mxu0 %v75
    %v390 = vpop.f32.mrb[0].mxu0
    %v391 = vadd.f32 0.0, %v390
    %v392 = vpop.f32.mrb[0].mxu0
    %v393 = vadd.f32 0.0, %v392
    %394 = vmatprep.mubr.f32.mxu0 0.0
    %395 = vmatmul.mubr.f32.gmra.mrb[0].mxu0 %v78
    %v396 = vpop.f32.mrb[0].mxu0
    %v397 = vadd.f32 0.0, %v396
    %v398 = vpop.f32.mrb[0].mxu0
    %v399 = vadd.f32 0.0, %v398
    %400 = vmatprep.mubr.f32.mxu0 0.0
    %401 = vmatmul.mubr.f32.gmra.mrb[0].mxu0 %v81
    %v402 = vpop.f32.mrb[0].mxu0
    %v403 = vadd.f32 0.0, %v402
    %v404 = vpop.f32.mrb[0].mxu0
    %v405 = vadd.f32 0.0, %v404
    %406 = vmatprep.mubr.f32.mxu0 0.0
    %407 = vmatmul.mubr.f32.gmra.mrb[0].mxu0 %v84
    %v408 = vpop.f32.mrb[0].mxu0
    %v409 = vadd.f32 0.0, %v408
    %v410 = vpop.f32.mrb[0].mxu0
    %v411 = vadd.f32 0.0, %v410
    %412 = vmatprep.mubr.f32.mxu0 0.0
    %413 = vmatmul.mubr.f32.gmra.mrb[0].mxu0 %v87
    %v414 = vpop.f32.mrb[0].mxu0
    %v415 = vadd.f32 0.0, %v414
    %v416 = vpop.f32.mrb[0].mxu0
    %v417 = vadd.f32 0.0, %v416
    %418 = vmatprep.mubr.f32.mxu0 0.0
    %419 = vmatmul.mubr.f32.gmra.mrb[0].mxu0 %v90
    %v420 = vpop.f32.mrb[0].mxu0
    %v421 = vadd.f32 0.0, %v420
    %v422 = vpop.f32.mrb[0].mxu0
    %v423 = vadd.f32 0.0, %v422
    %424 = vmatprep.mubr.f32.mxu0 0.0
    %425 = vmatmul.mubr.f32.gmra.mrb[0].mxu0 %v93
    %v426 = vpop.f32.mrb[0].mxu0
    %v427 = vadd.f32 0.0, %v426
    %v428 = vpop.f32.mrb[0].mxu0
    %v429 = vadd.f32 0.0, %v428
    %430 = vmatprep.mubr.f32.mxu0 0.0
    %431 = vmatmul.mubr.f32.gmra.mrb[0].mxu0 %v96
    %v432 = vpop.f32.mrb[0].mxu0
    %v433 = vadd.f32 0.0, %v432
    %v434 = vpop.f32.mrb[0].mxu0
    %v435 = vadd.f32 0.0, %v434
    %436 = vdwg.mxu0
    %437 = vmatprep.subr.mxu0 %v48
    %438 = vmatpush1.msra.mxu0 %v47
    %439 = vmatprep.subr.mxu0 %v56
    %440 = vmatpush1.msra.mxu0 %v55
    %441 = vmatprep.subr.mxu0 %v64
    %442 = vmatpush1.msra.mxu0 %v63
    %443 = vmatprep.subr.mxu0 %v72
    %444 = vmatpush1.msra.mxu0 %v71
    %445 = vmatprep.subr.mxu0 0.0
    %446 = vmatpush1.msra.mxu0 0.0
    %447 = vmatprep.subr.mxu0 0.0
    %448 = vmatpush1.msra.mxu0 0.0
    %449 = vmatprep.subr.mxu0 0.0
    %450 = vmatpush1.msra.mxu0 0.0
    %451 = vmatprep.subr.mxu0 0.0
    %452 = vmatpush1.msra.mxu0 0.0
    %453 = vmatprep.subr.mxu0 0.0
    %454 = vmatpush1.msra.mxu0 0.0
    %455 = vmatprep.subr.mxu0 0.0
    %456 = vmatpush1.msra.mxu0 0.0
    %457 = vmatprep.subr.mxu0 0.0
    %458 = vmatpush1.msra.mxu0 0.0
    %459 = vmatprep.subr.mxu0 0.0
    %460 = vmatpush1.msra.mxu0 0.0
    %461 = vmatprep.subr.mxu0 0.0
    %462 = vmatpush1.msra.mxu0 0.0
    %463 = vmatprep.subr.mxu0 0.0
    %464 = vmatpush1.msra.mxu0 0.0
    %465 = vmatprep.subr.mxu0 0.0
    %466 = vmatpush1.msra.mxu0 0.0
    %467 = vmatprep.subr.mxu0 0.0
    %468 = vmatpush1.msra.mxu0 0.0
    %469 = vmatprep.subr.mxu0 0.0
    %470 = vmatpush1.msra.mxu0 0.0
    %471 = vmatprep.subr.mxu0 0.0
    %472 = vmatpush1.msra.mxu0 0.0
    %473 = vmatprep.subr.mxu0 0.0
    %474 = vmatpush1.msra.mxu0 0.0
    %475 = vmatprep.subr.mxu0 0.0
    %476 = vmatpush1.msra.mxu0 0.0
    %477 = vmatprep.subr.mxu0 0.0
    %478 = vmatpush1.msra.mxu0 0.0
    %479 = vmatprep.subr.mxu0 0.0
    %480 = vmatpush1.msra.mxu0 0.0
    %481 = vmatprep.subr.mxu0 0.0
    %482 = vmatpush1.msra.mxu0 0.0
    %483 = vmatprep.subr.mxu0 0.0
    %484 = vmatpush1.msra.mxu0 0.0
    %485 = vmatprep.subr.mxu0 0.0
    %486 = vmatpush1.msra.mxu0 0.0
    %487 = vmatprep.subr.mxu0 0.0
    %488 = vmatpush1.msra.mxu0 0.0
    %489 = vmatprep.subr.mxu0 0.0
    %490 = vmatpush1.msra.mxu0 0.0
    %491 = vmatprep.subr.mxu0 0.0
    %492 = vmatpush1.msra.mxu0 0.0
    %493 = vmatprep.subr.mxu0 0.0
    %494 = vmatpush1.msra.mxu0 0.0
    %495 = vmatprep.subr.mxu0 0.0
    %496 = vmatpush1.msra.mxu0 0.0
    %497 = vmatprep.subr.mxu0 0.0
    %498 = vmatpush1.msra.mxu0 0.0
    %499 = vmatprep.subr.mxu0 0.0
    %500 = vmatpush1.msra.mxu0 0.0
    %501 = vmatprep.mubr.f32.mxu0 0.0
    %502 = vmatmul.mubr.f32.gmra.mrb[0].mxu0 %v75
    %v503 = vpop.f32.mrb[0].mxu0
    %v504 = vadd.f32 0.0, %v503
    %v505 = vpop.f32.mrb[0].mxu0
    %v506 = vadd.f32 0.0, %v505
    %507 = vmatprep.mubr.f32.mxu0 0.0
    %508 = vmatmul.mubr.f32.gmra.mrb[0].mxu0 %v78
    %v509 = vpop.f32.mrb[0].mxu0
    %v510 = vadd.f32 0.0, %v509
    %v511 = vpop.f32.mrb[0].mxu0
    %v512 = vadd.f32 0.0, %v511
    %513 = vmatprep.mubr.f32.mxu0 0.0
    %514 = vmatmul.mubr.f32.gmra.mrb[0].mxu0 %v81
    %v515 = vpop.f32.mrb[0].mxu0
    %v516 = vadd.f32 0.0, %v515
    %v517 = vpop.f32.mrb[0].mxu0
    %v518 = vadd.f32 0.0, %v517
    %519 = vmatprep.mubr.f32.mxu0 0.0
    %520 = vmatmul.mubr.f32.gmra.mrb[0].mxu0 %v84
    %v521 = vpop.f32.mrb[0].mxu0
    %v522 = vadd.f32 0.0, %v521
    %v523 = vpop.f32.mrb[0].mxu0
    %v524 = vadd.f32 0.0, %v523
    %525 = vmatprep.mubr.f32.mxu0 0.0
    %526 = vmatmul.mubr.f32.gmra.mrb[0].mxu0 %v87
    %v527 = vpop.f32.mrb[0].mxu0
    %v528 = vadd.f32 0.0, %v527
    %v529 = vpop.f32.mrb[0].mxu0
    %v530 = vadd.f32 0.0, %v529
    %531 = vmatprep.mubr.f32.mxu0 0.0
    %532 = vmatmul.mubr.f32.gmra.mrb[0].mxu0 %v90
    %v533 = vpop.f32.mrb[0].mxu0
    %v534 = vadd.f32 0.0, %v533
    %v535 = vpop.f32.mrb[0].mxu0
    %v536 = vadd.f32 0.0, %v535
    %537 = vmatprep.mubr.f32.mxu0 0.0
    %538 = vmatmul.mubr.f32.gmra.mrb[0].mxu0 %v93
    %v539 = vpop.f32.mrb[0].mxu0
    %v540 = vadd.f32 0.0, %v539
    %v541 = vpop.f32.mrb[0].mxu0
    %v542 = vadd.f32 0.0, %v541
    %543 = vmatprep.mubr.f32.mxu0 0.0
    %544 = vmatmul.mubr.f32.gmra.mrb[0].mxu0 %v96
    %v545 = vpop.f32.mrb[0].mxu0
    %v546 = vadd.f32 0.0, %v545
    %v547 = vpop.f32.mrb[0].mxu0
    %v548 = vadd.f32 0.0, %v547
    %549 = vdwg.mxu0
    %v551 = vlaneseq
    %v552 = vshrl.u32 %v551, 7
    %v553 = vsub.s32 0, %v552
    %v554 = vrot.slane %v32, %v553
    %v555 = vlaneseq
    %v556 = vshrl.u32 %v555, 7
    %v557 = vsub.s32 1, %v556
    %v558 = vrot.slane %v32, %v557
    %v559 = vlaneseq
    %v560 = vshrl.u32 %v559, 7
    %v561 = vsub.s32 2, %v560
    %v562 = vrot.slane %v32, %v561
    %v563 = vlaneseq
    %v564 = vshrl.u32 %v563, 7
    %v565 = vsub.s32 3, %v564
    %v566 = vrot.slane %v32, %v565
    %v567 = vlaneseq
    %v568 = vshrl.u32 %v567, 7
    %v569 = vsub.s32 4, %v568
    %v570 = vrot.slane %v32, %v569
    %v571 = vlaneseq
    %v572 = vshrl.u32 %v571, 7
    %v573 = vsub.s32 5, %v572
    %v574 = vrot.slane %v32, %v573
    %v575 = vlaneseq
    %v576 = vshrl.u32 %v575, 7
    %v577 = vsub.s32 6, %v576
    %v578 = vrot.slane %v32, %v577
    %v579 = vlaneseq
    %v580 = vshrl.u32 %v579, 7
    %v581 = vsub.s32 7, %v580
    %v582 = vrot.slane %v32, %v581
    %v591 = vadd.f32 %v554, %v165
    %v592 = vadd.f32 %v558, %v167
    %v593 = vadd.f32 %v562, %v278
    %v594 = vadd.f32 %v566, %v280
    %v595 = vadd.f32 %v570, %v391
    %v596 = vadd.f32 %v574, %v393
    %v597 = vadd.f32 %v578, %v504
    %v598 = vadd.f32 %v582, %v506
    %v599 = vadd.f32 %v554, %v171
    %v600 = vadd.f32 %v558, %v173
    %v601 = vadd.f32 %v562, %v284
    %v602 = vadd.f32 %v566, %v286
    %v603 = vadd.f32 %v570, %v397
    %v604 = vadd.f32 %v574, %v399
    %v605 = vadd.f32 %v578, %v510
    %v606 = vadd.f32 %v582, %v512
    %v607 = vadd.f32 %v554, %v177
    %v608 = vadd.f32 %v558, %v179
    %v609 = vadd.f32 %v562, %v290
    %v610 = vadd.f32 %v566, %v292
    %v611 = vadd.f32 %v570, %v403
    %v612 = vadd.f32 %v574, %v405
    %v613 = vadd.f32 %v578, %v516
    %v614 = vadd.f32 %v582, %v518
    %v615 = vadd.f32 %v554, %v183
    %v616 = vadd.f32 %v558, %v185
    %v617 = vadd.f32 %v562, %v296
    %v618 = vadd.f32 %v566, %v298
    %v619 = vadd.f32 %v570, %v409
    %v620 = vadd.f32 %v574, %v411
    %v621 = vadd.f32 %v578, %v522
    %v622 = vadd.f32 %v582, %v524
    %v623 = vadd.f32 %v554, %v189
    %v624 = vadd.f32 %v558, %v191
    %v625 = vadd.f32 %v562, %v302
    %v626 = vadd.f32 %v566, %v304
    %v627 = vadd.f32 %v570, %v415
    %v628 = vadd.f32 %v574, %v417
    %v629 = vadd.f32 %v578, %v528
    %v630 = vadd.f32 %v582, %v530
    %v631 = vadd.f32 %v554, %v195
    %v632 = vadd.f32 %v558, %v197
    %v633 = vadd.f32 %v562, %v308
    %v634 = vadd.f32 %v566, %v310
    %v635 = vadd.f32 %v570, %v421
    %v636 = vadd.f32 %v574, %v423
    %v637 = vadd.f32 %v578, %v534
    %v638 = vadd.f32 %v582, %v536
    %v639 = vadd.f32 %v554, %v201
    %v640 = vadd.f32 %v558, %v203
    %v641 = vadd.f32 %v562, %v314
    %v642 = vadd.f32 %v566, %v316
    %v643 = vadd.f32 %v570, %v427
    %v644 = vadd.f32 %v574, %v429
    %v645 = vadd.f32 %v578, %v540
    %v646 = vadd.f32 %v582, %v542
    %v647 = vadd.f32 %v554, %v207
    %v648 = vadd.f32 %v558, %v209
    %v649 = vadd.f32 %v562, %v320
    %v650 = vadd.f32 %v566, %v322
    %v651 = vadd.f32 %v570, %v433
    %v652 = vadd.f32 %v574, %v435
    %v653 = vadd.f32 %v578, %v546
    %v654 = vadd.f32 %v582, %v548
    %655 = vst [vmem:[#allocation5] sm:$0xff] %v591
    %656 = vst [vmem:[#allocation5 + $0x8] sm:$0xff] %v592
    %657 = vst [vmem:[#allocation5 + $0x10] sm:$0xff] %v593
    %658 = vst [vmem:[#allocation5 + $0x18] sm:$0xff] %v594
    %659 = vst [vmem:[#allocation5 + $0x20] sm:$0xff] %v599
    %660 = vst [vmem:[#allocation5 + $0x28] sm:$0xff] %v600
    %661 = vst [vmem:[#allocation5 + $0x30] sm:$0xff] %v601
    %662 = vst [vmem:[#allocation5 + $0x38] sm:$0xff] %v602
    %663 = vst [vmem:[#allocation5 + $0x40] sm:$0xff] %v607
    %664 = vst [vmem:[#allocation5 + $0x48] sm:$0xff] %v608
    %665 = vst [vmem:[#allocation5 + $0x50] sm:$0xff] %v609
    %666 = vst [vmem:[#allocation5 + $0x58] sm:$0xff] %v610
    %667 = vst [vmem:[#allocation5 + $0x60] sm:$0xff] %v615
    %668 = vst [vmem:[#allocation5 + $0x68] sm:$0xff] %v616
    %669 = vst [vmem:[#allocation5 + $0x70] sm:$0xff] %v617
    %670 = vst [vmem:[#allocation5 + $0x78] sm:$0xff] %v618
    %671 = vst [vmem:[#allocation5 + $0x80] sm:$0xff] %v623
    %672 = vst [vmem:[#allocation5 + $0x88] sm:$0xff] %v624
    %673 = vst [vmem:[#allocation5 + $0x90] sm:$0xff] %v625
    %674 = vst [vmem:[#allocation5 + $0x98] sm:$0xff] %v626
    %675 = vst [vmem:[#allocation5 + $0xa0] sm:$0xff] %v631
    %676 = vst [vmem:[#allocation5 + $0xa8] sm:$0xff] %v632
    %677 = vst [vmem:[#allocation5 + $0xb0] sm:$0xff] %v633
    %678 = vst [vmem:[#allocation5 + $0xb8] sm:$0xff] %v634
    %679 = vst [vmem:[#allocation5 + $0xc0] sm:$0xff] %v639
    %680 = vst [vmem:[#allocation5 + $0xc8] sm:$0xff] %v640
    %681 = vst [vmem:[#allocation5 + $0xd0] sm:$0xff] %v641
    %682 = vst [vmem:[#allocation5 + $0xd8] sm:$0xff] %v642
    %683 = vst [vmem:[#allocation5 + $0xe0] sm:$0xff] %v647
    %684 = vst [vmem:[#allocation5 + $0xe8] sm:$0xff] %v648
    %685 = vst [vmem:[#allocation5 + $0xf0] sm:$0xff] %v649
    %686 = vst [vmem:[#allocation5 + $0xf8] sm:$0xff] %v650
    %687 = vst [vmem:[#allocation6] sm:$0xff] %v595
    %688 = vst [vmem:[#allocation6 + $0x8] sm:$0xff] %v596
    %689 = vst [vmem:[#allocation6 + $0x10] sm:$0xff] %v597
    %690 = vst [vmem:[#allocation6 + $0x18] sm:$0xff] %v598
    %691 = vst [vmem:[#allocation6 + $0x20] sm:$0xff] %v603
    %692 = vst [vmem:[#allocation6 + $0x28] sm:$0xff] %v604
    %693 = vst [vmem:[#allocation6 + $0x30] sm:$0xff] %v605
    %694 = vst [vmem:[#allocation6 + $0x38] sm:$0xff] %v606
    %695 = vst [vmem:[#allocation6 + $0x40] sm:$0xff] %v611
    %696 = vst [vmem:[#allocation6 + $0x48] sm:$0xff] %v612
    %697 = vst [vmem:[#allocation6 + $0x50] sm:$0xff] %v613
    %698 = vst [vmem:[#allocation6 + $0x58] sm:$0xff] %v614
    %699 = vst [vmem:[#allocation6 + $0x60] sm:$0xff] %v619
    %700 = vst [vmem:[#allocation6 + $0x68] sm:$0xff] %v620
    %701 = vst [vmem:[#allocation6 + $0x70] sm:$0xff] %v621
    %702 = vst [vmem:[#allocation6 + $0x78] sm:$0xff] %v622
    %703 = vst [vmem:[#allocation6 + $0x80] sm:$0xff] %v627
    %704 = vst [vmem:[#allocation6 + $0x88] sm:$0xff] %v628
    %705 = vst [vmem:[#allocation6 + $0x90] sm:$0xff] %v629
    %706 = vst [vmem:[#allocation6 + $0x98] sm:$0xff] %v630
    %707 = vst [vmem:[#allocation6 + $0xa0] sm:$0xff] %v635
    %708 = vst [vmem:[#allocation6 + $0xa8] sm:$0xff] %v636
    %709 = vst [vmem:[#allocation6 + $0xb0] sm:$0xff] %v637
    %710 = vst [vmem:[#allocation6 + $0xb8] sm:$0xff] %v638
    %711 = vst [vmem:[#allocation6 + $0xc0] sm:$0xff] %v643
    %712 = vst [vmem:[#allocation6 + $0xc8] sm:$0xff] %v644
    %713 = vst [vmem:[#allocation6 + $0xd0] sm:$0xff] %v645
    %714 = vst [vmem:[#allocation6 + $0xd8] sm:$0xff] %v646
    %715 = vst [vmem:[#allocation6 + $0xe0] sm:$0xff] %v651
    %716 = vst [vmem:[#allocation6 + $0xe8] sm:$0xff] %v652
    %717 = vst [vmem:[#allocation6 + $0xf0] sm:$0xff] %v653
    %718 = vst [vmem:[#allocation6 + $0xf8] sm:$0xff] %v654
    // Predicated region
    $region18: #{tpu_custom_call.1} parent=1 // pred_check
      _
    $region19: #{tpu_custom_call.1} parent=1 // pred_check_branch
      %720 = sbr.rel (0) target = $region21
    $region20: #{tpu_custom_call.1} parent=1 // pred_region
      %s722 = ssub.s32 4096, 4096
      %723 = vsyncadd [#allocation4], %s722
      %s724 = sshll.u32 [#allocation5], 4
      %s725 = int_to_ptr.vmem [resolvable:$true] %s724
      %730 = dma.vmem_to_hbm [thread:$0]  %s725, 4096, %s3, [#allocation4], 512, 512, 32
    $region21: #{tpu_custom_call.1} parent=1 // pred_fallthru
      _
    // Predicated region
    $region22: #{tpu_custom_call.1} parent=1 // pred_check
      _
    $region23: #{tpu_custom_call.1} parent=1 // pred_check_branch
      %732 = sbr.rel (0) target = $region25
    $region24: #{tpu_custom_call.1} parent=1 // pred_region
      %s734 = ssub.s32 4096, 4096
      %735 = vsyncadd [#allocation7], %s734
      %s736 = sshll.u32 [#allocation6], 4
      %s737 = int_to_ptr.vmem [resolvable:$true] %s736
      %742 = dma.vmem_to_hbm [thread:$0]  %s737, 4096, %s4, [#allocation7], 512, 512, 32
    $region25: #{tpu_custom_call.1} parent=1 // pred_fallthru
      _
    // Predicated region
    $region26: #{tpu_custom_call.1} parent=1 // pred_check
      _
    $region27: #{tpu_custom_call.1} parent=1 // pred_check_branch
      %744 = sbr.rel (0) target = $region29
    $region28: #{tpu_custom_call.1} parent=1 // pred_region
      %745 = dma.done [#allocation4], 4096
    $region29: #{tpu_custom_call.1} parent=1 // pred_fallthru
      _
    // Predicated region
    $region30: #{tpu_custom_call.1} parent=1 // pred_check
      _
    $region31: #{tpu_custom_call.1} parent=1 // pred_check_branch
      %747 = sbr.rel (0) target = $region33
    $region32: #{tpu_custom_call.1} parent=1 // pred_region
      %748 = dma.done [#allocation7], 4096
    $region33: #{tpu_custom_call.1} parent=1 // pred_fallthru
      _
    %749 = vsyncpa [#allocation3], 1
    %750 = vsyncpa [#allocation4], 1
    %751 = vsyncpa [#allocation7], 1

</llo_original>
